<compile_context>
chip_gen: v7x
topology: tpu7x:2x2x1
jax: 0.10.0
libtpu: 0.0.40
codegen_flags: <defaults>
</compile_context>

<pallas_src>
import jax
import jax.numpy as jnp
from jax.experimental import pallas as pl
from jax.experimental.pallas import tpu as pltpu


def _round_up(v, m):
    return -(-v // m) * m


def qkv_kernel(x_ref, wq_ref, wk_ref, wv_ref, bq_ref, bk_ref, bv_ref,
               q_ref, k_ref, v_ref, acc_q, acc_k, acc_v):
    """One (i, j, kk) grid step: accumulate x-tile @ w-tiles on the MXU."""
    kk = pl.program_id(2)

    @pl.when(kk == 0)
    def _init():
        acc_q[...] = jnp.zeros_like(acc_q)
        acc_k[...] = jnp.zeros_like(acc_k)
        acc_v[...] = jnp.zeros_like(acc_v)

    x = x_ref[...]
    acc_q[...] += jnp.dot(x, wq_ref[...], preferred_element_type=jnp.float32)
    acc_k[...] += jnp.dot(x, wk_ref[...], preferred_element_type=jnp.float32)
    acc_v[...] += jnp.dot(x, wv_ref[...], preferred_element_type=jnp.float32)

    @pl.when(kk == pl.num_programs(2) - 1)
    def _finalize():
        # Bias added exactly once, after the full reduction.
        q_ref[...] = (acc_q[...] + bq_ref[...]).astype(q_ref.dtype)
        k_ref[...] = (acc_k[...] + bk_ref[...]).astype(k_ref.dtype)
        v_ref[...] = (acc_v[...] + bv_ref[...]).astype(v_ref.dtype)


def make_gpt_qkv_gen(weight, bias, *, compute_dtype=jnp.float32,
                     out_dtype=jnp.float32, tm_max=256, tn_max=512, tk_max=512):
    """Factory: one-time weight prep, returns a jitted x -> (q, k, v) callable.

    weight: (3E, E) torch-layout Linear weight.  bias: (3E,).
    compute_dtype: dtype fed to the MXU (use jnp.bfloat16 in production).
    """
    three_e, E = weight.shape
    assert three_e == 3 * E and bias.shape == (three_e,)

    # Feature-axis tiling (lane dims must be 128-multiples) -> pad once here.
    tn = min(tn_max, _round_up(E, 128))
    Ep = _round_up(E, tn)          # padded per-head output width
    tk = min(tk_max, _round_up(E, 128))
    Ek = _round_up(E, tk)          # padded reduction depth

    def pad_w(w_head_t):           # (E, E) transposed head -> (Ek, Ep)
        return jnp.zeros((Ek, Ep), compute_dtype).at[:E, :E].set(
            w_head_t.astype(compute_dtype))

    def pad_b(b_head):             # (E,) -> (1, Ep), kept f32 (post-accumulate add)
        return jnp.zeros((1, Ep), jnp.float32).at[0, :E].set(
            b_head.astype(jnp.float32))

    # One-time prep: split fused weight, pre-transpose to (E, E), pad, cast.
    wq_p = pad_w(weight[:E].T)
    wk_p = pad_w(weight[E:2 * E].T)
    wv_p = pad_w(weight[2 * E:].T)
    bq_p = pad_b(bias[:E])
    bk_p = pad_b(bias[E:2 * E])
    bv_p = pad_b(bias[2 * E:])

    @jax.jit
    def qkv(x):
        N = x.shape[0]
        assert x.shape == (N, E)

        tm = min(tm_max, _round_up(N, 8))
        Np = _round_up(N, tm)

        xp = x.astype(compute_dtype)
        if (Np, Ek) != (N, E):
            xp = jnp.zeros((Np, Ek), compute_dtype).at[:N, :E].set(xp)

        grid = (Np // tm, Ep // tn, Ek // tk)

        in_sz = jnp.dtype(compute_dtype).itemsize
        out_sz = jnp.dtype(out_dtype).itemsize
        # Rough per-step VMEM budget: double-buffered ins/outs + 3 f32 accs.
        vmem_est = (2 * (tm * tk * in_sz + 3 * tk * tn * in_sz
                         + 3 * tn * 4 + 3 * tm * tn * out_sz)
                    + 3 * tm * tn * 4)
        vmem_limit = int(min(64 * 2 ** 20, max(16 * 2 ** 20, 2 * vmem_est)))

        flops = 2 * Np * Ek * (3 * Ep)
        bytes_accessed = ((Np * Ek + 3 * Ek * Ep) * in_sz
                          + 3 * Ep * 4 + 3 * Np * Ep * out_sz)

        out_shape = jax.ShapeDtypeStruct((Np, Ep), out_dtype)
        q, k, v = pl.pallas_call(
            qkv_kernel,
            out_shape=(out_shape, out_shape, out_shape),
            grid_spec=pltpu.PrefetchScalarGridSpec(
                num_scalar_prefetch=0,
                grid=grid,
                in_specs=[
                    pl.BlockSpec((tm, tk), lambda i, j, kk: (i, kk)),   # x
                    pl.BlockSpec((tk, tn), lambda i, j, kk: (kk, j)),   # Wq^T
                    pl.BlockSpec((tk, tn), lambda i, j, kk: (kk, j)),   # Wk^T
                    pl.BlockSpec((tk, tn), lambda i, j, kk: (kk, j)),   # Wv^T
                    pl.BlockSpec((1, tn), lambda i, j, kk: (0, j)),     # bq
                    pl.BlockSpec((1, tn), lambda i, j, kk: (0, j)),     # bk
                    pl.BlockSpec((1, tn), lambda i, j, kk: (0, j)),     # bv
                ],
                out_specs=(
                    pl.BlockSpec((tm, tn), lambda i, j, kk: (i, j)),    # q
                    pl.BlockSpec((tm, tn), lambda i, j, kk: (i, j)),    # k
                    pl.BlockSpec((tm, tn), lambda i, j, kk: (i, j)),    # v
                ),
                scratch_shapes=[pltpu.VMEM((tm, tn), jnp.float32)] * 3,
            ),
            compiler_params=pltpu.CompilerParams(
                dimension_semantics=("parallel", "parallel", "arbitrary"),
                vmem_limit_bytes=vmem_limit,
            ),
            cost_estimate=pl.CostEstimate(
                flops=flops, transcendentals=0, bytes_accessed=bytes_accessed),
        )(xp, wq_p, wk_p, wv_p, bq_p, bk_p, bv_p)

        # Strip padding (no-op slices when shapes are already tile-aligned).
        return q[:N, :E], k[:N, :E], v[:N, :E]

    return qkv


if __name__ == "__main__":
    embed_dim = 32
    seq = 8

    key = jax.random.PRNGKey(0)
    kx, kw = jax.random.split(key)

    # Parameter init mirroring the torch module's __init__:
    #   nn.init.uniform_(weight) -> U[0, 1), shape (3*E, E); bias.fill_(0.1).
    weight = jax.random.uniform(kw, (3 * embed_dim, embed_dim), dtype=jnp.float32)
    bias = jnp.full((3 * embed_dim,), 0.1, dtype=jnp.float32)

    x = jax.random.normal(kx, (seq, embed_dim), dtype=jnp.float32)

    # Reference (torch semantics): y = x @ W^T + b, split along dim=1.
    y_ref = x @ weight.T + bias
    q_ref = y_ref[:, :embed_dim]
    k_ref = y_ref[:, embed_dim:2 * embed_dim]
    v_ref = y_ref[:, 2 * embed_dim:]

    # f32 MXU path: exact check.
    qkv_f32 = make_gpt_qkv_gen(weight, bias, compute_dtype=jnp.float32)
    q, k, v = qkv_f32(x)
    jax.block_until_ready((q, k, v))
    assert q.shape == (seq, embed_dim)
    assert jnp.allclose(q, q_ref, atol=1e-5, rtol=1e-5)
    assert jnp.allclose(k, k_ref, atol=1e-5, rtol=1e-5)
    assert jnp.allclose(v, v_ref, atol=1e-5, rtol=1e-5)

    # bf16 MXU path (production setting from the perf review): bf16-level tolerance.
    qkv_bf16 = make_gpt_qkv_gen(weight, bias, compute_dtype=jnp.bfloat16)
    qb, kb, vb = qkv_bf16(x)
    jax.block_until_ready((qb, kb, vb))
    assert jnp.allclose(qb, q_ref, atol=2.5e-1, rtol=2e-2)
    assert jnp.allclose(kb, k_ref, atol=2.5e-1, rtol=2e-2)
    assert jnp.allclose(vb, v_ref, atol=2.5e-1, rtol=2e-2)

    print("KERNEL_OK")
</pallas_src>

<mosaic_0001>
module attributes {stable_mosaic.version = 11 : i64} {
  func.func @qkv_kernel(%arg0: i32, %arg1: i32, %arg2: i32, %arg3: memref<8x128xf32, #tpu.memory_space<vmem>>, %arg4: memref<128x128xf32, #tpu.memory_space<vmem>>, %arg5: memref<128x128xf32, #tpu.memory_space<vmem>>, %arg6: memref<128x128xf32, #tpu.memory_space<vmem>>, %arg7: memref<1x128xf32, #tpu.memory_space<vmem>>, %arg8: memref<1x128xf32, #tpu.memory_space<vmem>>, %arg9: memref<1x128xf32, #tpu.memory_space<vmem>>, %arg10: memref<8x128xf32, #tpu.memory_space<vmem>>, %arg11: memref<8x128xf32, #tpu.memory_space<vmem>>, %arg12: memref<8x128xf32, #tpu.memory_space<vmem>>, %arg13: memref<8x128xf32, #tpu.memory_space<vmem>>, %arg14: memref<8x128xf32, #tpu.memory_space<vmem>>, %arg15: memref<8x128xf32, #tpu.memory_space<vmem>>) attributes {dimension_semantics = [#tpu.dimension_semantics<parallel>, #tpu.dimension_semantics<parallel>, #tpu.dimension_semantics<arbitrary>], iteration_bounds = array<i64: 1, 1, 1>, scalar_prefetch = 0 : i64, scratch_operands = 3 : i64, tpu.core_type = #tpu.core_type<tc>, window_params = [{transform_indices = @transform_0, window_bounds = array<i64: 8, 128>}, {transform_indices = @transform_1, window_bounds = array<i64: 128, 128>}, {transform_indices = @transform_2, window_bounds = array<i64: 128, 128>}, {transform_indices = @transform_3, window_bounds = array<i64: 128, 128>}, {transform_indices = @transform_4, window_bounds = array<i64: 1, 128>}, {transform_indices = @transform_5, window_bounds = array<i64: 1, 128>}, {transform_indices = @transform_6, window_bounds = array<i64: 1, 128>}, {transform_indices = @transform_7, window_bounds = array<i64: 8, 128>}, {transform_indices = @transform_8, window_bounds = array<i64: 8, 128>}, {transform_indices = @transform_9, window_bounds = array<i64: 8, 128>}]} {
    %c0_i32 = arith.constant 0 : i32
    %0 = arith.cmpi eq, %arg2, %c0_i32 : i32
    %1 = arith.extui %0 : i1 to i32
    %c0_i32_0 = arith.constant 0 : i32
    %2 = arith.cmpi ne, %1, %c0_i32_0 : i32
    scf.if %2 {
      %cst_24 = arith.constant 0.000000e+00 : f32
      %22 = vector.broadcast %cst_24 : f32 to vector<8x128xf32>
      %c0_25 = arith.constant 0 : index
      %c0_26 = arith.constant 0 : index
      %23 = vector.load %arg13[%c0_25, %c0_26] : memref<8x128xf32, #tpu.memory_space<vmem>>, vector<8x128xf32>
      tpu.vector_store %arg13[%c0_25, %c0_26], %22 {strides = array<i32>} : memref<8x128xf32, #tpu.memory_space<vmem>>, vector<8x128xf32>,
      %cst_27 = arith.constant 0.000000e+00 : f32
      %24 = vector.broadcast %cst_27 : f32 to vector<8x128xf32>
      %c0_28 = arith.constant 0 : index
      %c0_29 = arith.constant 0 : index
      %25 = vector.load %arg14[%c0_28, %c0_29] : memref<8x128xf32, #tpu.memory_space<vmem>>, vector<8x128xf32>
      tpu.vector_store %arg14[%c0_28, %c0_29], %24 {strides = array<i32>} : memref<8x128xf32, #tpu.memory_space<vmem>>, vector<8x128xf32>,
      %cst_30 = arith.constant 0.000000e+00 : f32
      %26 = vector.broadcast %cst_30 : f32 to vector<8x128xf32>
      %c0_31 = arith.constant 0 : index
      %c0_32 = arith.constant 0 : index
      %27 = vector.load %arg15[%c0_31, %c0_32] : memref<8x128xf32, #tpu.memory_space<vmem>>, vector<8x128xf32>
      tpu.vector_store %arg15[%c0_31, %c0_32], %26 {strides = array<i32>} : memref<8x128xf32, #tpu.memory_space<vmem>>, vector<8x128xf32>,
    } else {
    }
    %c0 = arith.constant 0 : index
    %c0_1 = arith.constant 0 : index
    %3 = vector.load %arg3[%c0, %c0_1] : memref<8x128xf32, #tpu.memory_space<vmem>>, vector<8x128xf32>
    %c0_2 = arith.constant 0 : index
    %c0_3 = arith.constant 0 : index
    %4 = vector.load %arg13[%c0_2, %c0_3] : memref<8x128xf32, #tpu.memory_space<vmem>>, vector<8x128xf32>
    %c0_4 = arith.constant 0 : index
    %c0_5 = arith.constant 0 : index
    %5 = vector.load %arg4[%c0_4, %c0_5] : memref<128x128xf32, #tpu.memory_space<vmem>>, vector<128x128xf32>
    %cst = arith.constant dense<0.000000e+00> : vector<8x128xf32>
    %6 = tpu.matmul %3, %5, %cst {dimension_numbers = #tpu.dot_dimension_numbers<[1], [0], [0], [1], [0, 0, 1, 1], [], []>} : vector<8x128xf32>, vector<128x128xf32>, vector<8x128xf32> -> vector<8x128xf32>
    %7 = arith.addf %4, %6 : vector<8x128xf32>
    %c0_6 = arith.constant 0 : index
    %c0_7 = arith.constant 0 : index
    %8 = vector.load %arg13[%c0_6, %c0_7] : memref<8x128xf32, #tpu.memory_space<vmem>>, vector<8x128xf32>
    tpu.vector_store %arg13[%c0_6, %c0_7], %7 {strides = array<i32>} : memref<8x128xf32, #tpu.memory_space<vmem>>, vector<8x128xf32>,
    %c0_8 = arith.constant 0 : index
    %c0_9 = arith.constant 0 : index
    %9 = vector.load %arg14[%c0_8, %c0_9] : memref<8x128xf32, #tpu.memory_space<vmem>>, vector<8x128xf32>
    %c0_10 = arith.constant 0 : index
    %c0_11 = arith.constant 0 : index
    %10 = vector.load %arg5[%c0_10, %c0_11] : memref<128x128xf32, #tpu.memory_space<vmem>>, vector<128x128xf32>
    %cst_12 = arith.constant dense<0.000000e+00> : vector<8x128xf32>
    %11 = tpu.matmul %3, %10, %cst_12 {dimension_numbers = #tpu.dot_dimension_numbers<[1], [0], [0], [1], [0, 0, 1, 1], [], []>} : vector<8x128xf32>, vector<128x128xf32>, vector<8x128xf32> -> vector<8x128xf32>
    %12 = arith.addf %9, %11 : vector<8x128xf32>
    %c0_13 = arith.constant 0 : index
    %c0_14 = arith.constant 0 : index
    %13 = vector.load %arg14[%c0_13, %c0_14] : memref<8x128xf32, #tpu.memory_space<vmem>>, vector<8x128xf32>
    tpu.vector_store %arg14[%c0_13, %c0_14], %12 {strides = array<i32>} : memref<8x128xf32, #tpu.memory_space<vmem>>, vector<8x128xf32>,
    %c0_15 = arith.constant 0 : index
    %c0_16 = arith.constant 0 : index
    %14 = vector.load %arg15[%c0_15, %c0_16] : memref<8x128xf32, #tpu.memory_space<vmem>>, vector<8x128xf32>
    %c0_17 = arith.constant 0 : index
    %c0_18 = arith.constant 0 : index
    %15 = vector.load %arg6[%c0_17, %c0_18] : memref<128x128xf32, #tpu.memory_space<vmem>>, vector<128x128xf32>
    %cst_19 = arith.constant dense<0.000000e+00> : vector<8x128xf32>
    %16 = tpu.matmul %3, %15, %cst_19 {dimension_numbers = #tpu.dot_dimension_numbers<[1], [0], [0], [1], [0, 0, 1, 1], [], []>} : vector<8x128xf32>, vector<128x128xf32>, vector<8x128xf32> -> vector<8x128xf32>
    %17 = arith.addf %14, %16 : vector<8x128xf32>
    %c0_20 = arith.constant 0 : index
    %c0_21 = arith.constant 0 : index
    %18 = vector.load %arg15[%c0_20, %c0_21] : memref<8x128xf32, #tpu.memory_space<vmem>>, vector<8x128xf32>
    tpu.vector_store %arg15[%c0_20, %c0_21], %17 {strides = array<i32>} : memref<8x128xf32, #tpu.memory_space<vmem>>, vector<8x128xf32>,
    %c0_i32_22 = arith.constant 0 : i32
    %19 = arith.cmpi eq, %arg2, %c0_i32_22 : i32
    %20 = arith.extui %19 : i1 to i32
    %c0_i32_23 = arith.constant 0 : i32
    %21 = arith.cmpi ne, %20, %c0_i32_23 : i32
    scf.if %21 {
      %c0_24 = arith.constant 0 : index
      %c0_25 = arith.constant 0 : index
      %22 = vector.load %arg13[%c0_24, %c0_25] : memref<8x128xf32, #tpu.memory_space<vmem>>, vector<8x128xf32>
      %c0_26 = arith.constant 0 : index
      %c0_27 = arith.constant 0 : index
      %23 = vector.load %arg7[%c0_26, %c0_27] : memref<1x128xf32, #tpu.memory_space<vmem>>, vector<1x128xf32>
      %24 = vector.broadcast %23 : vector<1x128xf32> to vector<8x128xf32>
      %25 = arith.addf %22, %24 : vector<8x128xf32>
      %c0_28 = arith.constant 0 : index
      %c0_29 = arith.constant 0 : index
      %26 = vector.load %arg10[%c0_28, %c0_29] : memref<8x128xf32, #tpu.memory_space<vmem>>, vector<8x128xf32>
      tpu.vector_store %arg10[%c0_28, %c0_29], %25 {strides = array<i32>} : memref<8x128xf32, #tpu.memory_space<vmem>>, vector<8x128xf32>,
      %c0_30 = arith.constant 0 : index
      %c0_31 = arith.constant 0 : index
      %27 = vector.load %arg14[%c0_30, %c0_31] : memref<8x128xf32, #tpu.memory_space<vmem>>, vector<8x128xf32>
      %c0_32 = arith.constant 0 : index
      %c0_33 = arith.constant 0 : index
      %28 = vector.load %arg8[%c0_32, %c0_33] : memref<1x128xf32, #tpu.memory_space<vmem>>, vector<1x128xf32>
      %29 = vector.broadcast %28 : vector<1x128xf32> to vector<8x128xf32>
      %30 = arith.addf %27, %29 : vector<8x128xf32>
      %c0_34 = arith.constant 0 : index
      %c0_35 = arith.constant 0 : index
      %31 = vector.load %arg11[%c0_34, %c0_35] : memref<8x128xf32, #tpu.memory_space<vmem>>, vector<8x128xf32>
      tpu.vector_store %arg11[%c0_34, %c0_35], %30 {strides = array<i32>} : memref<8x128xf32, #tpu.memory_space<vmem>>, vector<8x128xf32>,
      %c0_36 = arith.constant 0 : index
      %c0_37 = arith.constant 0 : index
      %32 = vector.load %arg15[%c0_36, %c0_37] : memref<8x128xf32, #tpu.memory_space<vmem>>, vector<8x128xf32>
      %c0_38 = arith.constant 0 : index
      %c0_39 = arith.constant 0 : index
      %33 = vector.load %arg9[%c0_38, %c0_39] : memref<1x128xf32, #tpu.memory_space<vmem>>, vector<1x128xf32>
      %34 = vector.broadcast %33 : vector<1x128xf32> to vector<8x128xf32>
      %35 = arith.addf %32, %34 : vector<8x128xf32>
      %c0_40 = arith.constant 0 : index
      %c0_41 = arith.constant 0 : index
      %36 = vector.load %arg12[%c0_40, %c0_41] : memref<8x128xf32, #tpu.memory_space<vmem>>, vector<8x128xf32>
      tpu.vector_store %arg12[%c0_40, %c0_41], %35 {strides = array<i32>} : memref<8x128xf32, #tpu.memory_space<vmem>>, vector<8x128xf32>,
    } else {
    }
    return
  }
  func.func @transform_0(%arg0: i32, %arg1: i32, %arg2: i32) -> (i32, i32) {
    %c0_i32 = arith.constant 0 : i32
    return %arg0, %arg2 : i32, i32
  }
  func.func @transform_1(%arg0: i32, %arg1: i32, %arg2: i32) -> (i32, i32) {
    %c0_i32 = arith.constant 0 : i32
    return %arg2, %arg1 : i32, i32
  }
  func.func @transform_2(%arg0: i32, %arg1: i32, %arg2: i32) -> (i32, i32) {
    %c0_i32 = arith.constant 0 : i32
    return %arg2, %arg1 : i32, i32
  }
  func.func @transform_3(%arg0: i32, %arg1: i32, %arg2: i32) -> (i32, i32) {
    %c0_i32 = arith.constant 0 : i32
    return %arg2, %arg1 : i32, i32
  }
  func.func @transform_4(%arg0: i32, %arg1: i32, %arg2: i32) -> (i32, i32) {
    %c0_i32 = arith.constant 0 : i32
    %c0_i32_0 = arith.constant 0 : i32
    return %c0_i32, %arg1 : i32, i32
  }
  func.func @transform_5(%arg0: i32, %arg1: i32, %arg2: i32) -> (i32, i32) {
    %c0_i32 = arith.constant 0 : i32
    %c0_i32_0 = arith.constant 0 : i32
    return %c0_i32, %arg1 : i32, i32
  }
  func.func @transform_6(%arg0: i32, %arg1: i32, %arg2: i32) -> (i32, i32) {
    %c0_i32 = arith.constant 0 : i32
    %c0_i32_0 = arith.constant 0 : i32
    return %c0_i32, %arg1 : i32, i32
  }
  func.func @transform_7(%arg0: i32, %arg1: i32, %arg2: i32) -> (i32, i32) {
    %c0_i32 = arith.constant 0 : i32
    return %arg0, %arg1 : i32, i32
  }
  func.func @transform_8(%arg0: i32, %arg1: i32, %arg2: i32) -> (i32, i32) {
    %c0_i32 = arith.constant 0 : i32
    return %arg0, %arg1 : i32, i32
  }
  func.func @transform_9(%arg0: i32, %arg1: i32, %arg2: i32) -> (i32, i32) {
    %c0_i32 = arith.constant 0 : i32
    return %arg0, %arg1 : i32, i32
  }
}

</mosaic_0001>

<llo_original>
// kernel: qkv.1
$region0: #{qkv.1}
  #allocation0 [shape = 'u32[]', space=smem, size = 0x4, offset = 0x4, fixed_abs, tag = 'smem constant byte address 0x4 - core index']
  #allocation1 [shape = 'u32[144,128]{1,0:T(1,128)}', space=vmem, size = 0x12000, scoped, tag = 'internal scratch']
  #allocation2 [shape = 'f32[8,128]{1,0:T(8,128)}', space=vmem, size = 0x1000, scoped, tag = 'scratch operand']
  #allocation3 [shape = 'f32[8,128]{1,0:T(8,128)}', space=vmem, size = 0x1000, scoped, tag = 'scratch operand']
  #allocation4 [shape = 'f32[8,128]{1,0:T(8,128)}', space=vmem, size = 0x1000, scoped, tag = 'scratch operand']
  %s0 = inlined_call_operand.vmem [shape: f32[8,128], index: 0, kind: input, shape index: {}]
  %s1 = inlined_call_operand.hbm [shape: f32[128,128], index: 1, kind: input, shape index: {}]
  %s2 = inlined_call_operand.hbm [shape: f32[128,128], index: 2, kind: input, shape index: {}]
  %s3 = inlined_call_operand.hbm [shape: f32[128,128], index: 3, kind: input, shape index: {}]
  %s4 = inlined_call_operand.vmem [shape: f32[1,128], index: 4, kind: input, shape index: {}, may-alias: {4,5,6}]
  %s5 = inlined_call_operand.vmem [shape: f32[1,128], index: 5, kind: input, shape index: {}, may-alias: {4,5,6}]
  %s6 = inlined_call_operand.vmem [shape: f32[1,128], index: 6, kind: input, shape index: {}, may-alias: {4,5,6}]
  %s7 = inlined_call_operand.hbm [shape: f32[8,128], index: 7, kind: output, shape index: {0}]
  %s8 = inlined_call_operand.hbm [shape: f32[8,128], index: 8, kind: output, shape index: {1}]
  %s9 = inlined_call_operand.hbm [shape: f32[8,128], index: 9, kind: output, shape index: {2}]
  %10 = xla_tuple %s7, %s8, %s9
  %s11 = sld [smem:[#allocation0]]
  $region74: #{qkv.1} parent=0
    _
  %s13 = ssub.s32 1, %s11
  %s14 = scalar_select 0, %s13, %s11
  $region1: #{qkv.1} parent=0
    #allocation5 [shape = 'u8[65536]{0}', space=vmem, size = 0x10000, scoped, tag = 'input window, operand 1, single buffered']
    #allocation6 [shape = 's32[1]{0}', space=sflag, size = 0x4, scoped, tag = 'scoped memory for qkv.1']
    #allocation7 [shape = 's32[1]{0}', space=sflag, size = 0x4, scoped, tag = 'scoped memory for qkv.1']
    #allocation8 [shape = 'u8[65536]{0}', space=vmem, size = 0x10000, scoped, tag = 'input window, operand 2, single buffered']
    #allocation9 [shape = 's32[1]{0}', space=sflag, size = 0x4, scoped, tag = 'scoped memory for qkv.1']
    #allocation10 [shape = 'u8[65536]{0}', space=vmem, size = 0x10000, scoped, tag = 'input window, operand 3, single buffered']
    #allocation11 [shape = 'u8[4096]{0}', space=vmem, size = 0x1000, scoped, tag = 'output window, operand 0, single buffered']
    #allocation12 [shape = 'u8[4096]{0}', space=vmem, size = 0x1000, scoped, tag = 'output window, operand 1, single buffered']
    #allocation13 [shape = 's32[1]{0}', space=sflag, size = 0x4, scoped, tag = 'scoped memory for qkv.1']
    #allocation14 [shape = 'u8[4096]{0}', space=vmem, size = 0x1000, scoped, tag = 'output window, operand 2, single buffered']
    %15 = vsyncpa [#allocation6], 0
    %16 = vsyncpa [#allocation9], 0
    %17 = vsyncpa [#allocation7], 0
    %18 = vsyncpa [#allocation13], 0
    // Predicated region
    $region2: #{qkv.1} parent=1 // pred_check
      _
    $region3: #{qkv.1} parent=1 // pred_check_branch
      %20 = sbr.rel (0) target = $region5
    $region4: #{qkv.1} parent=1 // pred_region
      _
    $region5: #{qkv.1} parent=1 // pred_fallthru
      _
    // Predicated region
    $region6: #{qkv.1} parent=1 // pred_check
      _
    $region7: #{qkv.1} parent=1 // pred_check_branch
      %22 = sbr.rel (0) target = $region9
    $region8: #{qkv.1} parent=1 // pred_region
      %s24 = ssub.s32 2048, 2048
      %25 = vsyncadd [#allocation6], %s24
      %s26 = sshll.u32 [#allocation5], 4
      %s27 = int_to_ptr.vmem [resolvable:$true] %s26
      %32 = dma.hbm_to_vmem [thread:$0]  %s1, 2048, %s27, [#allocation6], 128, 128, 8
    $region9: #{qkv.1} parent=1 // pred_fallthru
      _
    // Predicated region
    $region10: #{qkv.1} parent=1 // pred_check
      _
    $region11: #{qkv.1} parent=1 // pred_check_branch
      %34 = sbr.rel (0) target = $region13
    $region12: #{qkv.1} parent=1 // pred_region
      %s36 = ssub.s32 2048, 2048
      %37 = vsyncadd [#allocation9], %s36
      %s38 = sshll.u32 [#allocation8], 4
      %s39 = int_to_ptr.vmem [resolvable:$true] %s38
      %44 = dma.hbm_to_vmem [thread:$0]  %s2, 2048, %s39, [#allocation9], 128, 128, 8
    $region13: #{qkv.1} parent=1 // pred_fallthru
      _
    // Predicated region
    $region14: #{qkv.1} parent=1 // pred_check
      _
    $region15: #{qkv.1} parent=1 // pred_check_branch
      %46 = sbr.rel (0) target = $region17
    $region16: #{qkv.1} parent=1 // pred_region
      %s48 = ssub.s32 2048, 2048
      %49 = vsyncadd [#allocation9], %s48
      %s50 = sshll.u32 [#allocation10], 4
      %s51 = int_to_ptr.vmem [resolvable:$true] %s50
      %56 = dma.hbm_to_vmem [thread:$0]  %s3, 2048, %s51, [#allocation9], 128, 128, 8
    $region17: #{qkv.1} parent=1 // pred_fallthru
      _
    // Predicated region
    $region18: #{qkv.1} parent=1 // pred_check
      _
    $region19: #{qkv.1} parent=1 // pred_check_branch
      %58 = sbr.rel (0) target = $region21
    $region20: #{qkv.1} parent=1 // pred_region
      _
    $region21: #{qkv.1} parent=1 // pred_fallthru
      _
    // Predicated region
    $region22: #{qkv.1} parent=1 // pred_check
      _
    $region23: #{qkv.1} parent=1 // pred_check_branch
      %60 = sbr.rel (0) target = $region25
    $region24: #{qkv.1} parent=1 // pred_region
      _
    $region25: #{qkv.1} parent=1 // pred_fallthru
      _
    // Predicated region
    $region26: #{qkv.1} parent=1 // pred_check
      _
    $region27: #{qkv.1} parent=1 // pred_check_branch
      %62 = sbr.rel (0) target = $region29
    $region28: #{qkv.1} parent=1 // pred_region
      _
    $region29: #{qkv.1} parent=1 // pred_fallthru
      _
    // Predicated region
    $region30: #{qkv.1} parent=1 // pred_check
      _
    $region31: #{qkv.1} parent=1 // pred_check_branch
      %64 = sbr.rel (0) target = $region33
    $region32: #{qkv.1} parent=1 // pred_region
      %65 = dma.done [#allocation6], 2048
    $region33: #{qkv.1} parent=1 // pred_fallthru
      _
    // Predicated region
    $region34: #{qkv.1} parent=1 // pred_check
      _
    $region35: #{qkv.1} parent=1 // pred_check_branch
      %67 = sbr.rel (0) target = $region37
    $region36: #{qkv.1} parent=1 // pred_region
      %68 = dma.done [#allocation9], 2048
    $region37: #{qkv.1} parent=1 // pred_fallthru
      _
    // Predicated region
    $region38: #{qkv.1} parent=1 // pred_check
      _
    $region39: #{qkv.1} parent=1 // pred_check_branch
      %70 = sbr.rel (0) target = $region41
    $region40: #{qkv.1} parent=1 // pred_region
      %71 = dma.done [#allocation9], 2048
    $region41: #{qkv.1} parent=1 // pred_fallthru
      _
    %p72 = scmp.eq.s32.totalorder 0, 0
    // Predicated region
    $region42: #{qkv.1} parent=1 // pred_check
      %p73 = pneg %p72
    $region43: #{qkv.1} parent=1 // pred_check_branch
      %75 = sbr.rel (%p73) target = $region45
    $region44: #{qkv.1} parent=1 // pred_region
      %76 = vst [vmem:[#allocation2] sm:$0xff] 0.0
      %77 = vst [vmem:[#allocation3] sm:$0xff] 0.0
      %78 = vst [vmem:[#allocation4] sm:$0xff] 0.0
    $region45: #{qkv.1} parent=1 // pred_fallthru
      _
    %v79 = vld [vmem:[%s0] sm:$0xff]
    %v80 = vld [vmem:[#allocation2] sm:$0xff]
    %v81 = vld [vmem:[#allocation5] sm:$0xff]
    %v82 = vld [vmem:[#allocation5 + $0x8] sm:$0xff]
    %v83 = vld [vmem:[#allocation5 + $0x10] sm:$0xff]
    %v84 = vld [vmem:[#allocation5 + $0x18] sm:$0xff]
    %v85 = vld [vmem:[#allocation5 + $0x20] sm:$0xff]
    %v86 = vld [vmem:[#allocation5 + $0x28] sm:$0xff]
    %v87 = vld [vmem:[#allocation5 + $0x30] sm:$0xff]
    %v88 = vld [vmem:[#allocation5 + $0x38] sm:$0xff]
    %v89 = vld [vmem:[#allocation5 + $0x40] sm:$0xff]
    %v90 = vld [vmem:[#allocation5 + $0x48] sm:$0xff]
    %v91 = vld [vmem:[#allocation5 + $0x50] sm:$0xff]
    %v92 = vld [vmem:[#allocation5 + $0x58] sm:$0xff]
    %v93 = vld [vmem:[#allocation5 + $0x60] sm:$0xff]
    %v94 = vld [vmem:[#allocation5 + $0x68] sm:$0xff]
    %v95 = vld [vmem:[#allocation5 + $0x70] sm:$0xff]
    %v96 = vld [vmem:[#allocation5 + $0x78] sm:$0xff]
    %97 = vmatprep.subr.mxu0 0.0
    %98 = vmatpush1.msra.mxu0 %v81
    %99 = vmatprep.subr.mxu0 0.0
    %100 = vmatpush1.msra.mxu0 %v82
    %101 = vmatprep.subr.mxu0 0.0
    %102 = vmatpush1.msra.mxu0 %v83
    %103 = vmatprep.subr.mxu0 0.0
    %104 = vmatpush1.msra.mxu0 %v84
    %105 = vmatprep.subr.mxu0 0.0
    %106 = vmatpush1.msra.mxu0 %v85
    %107 = vmatprep.subr.mxu0 0.0
    %108 = vmatpush1.msra.mxu0 %v86
    %109 = vmatprep.subr.mxu0 0.0
    %110 = vmatpush1.msra.mxu0 %v87
    %111 = vmatprep.subr.mxu0 0.0
    %112 = vmatpush1.msra.mxu0 %v88
    %113 = vmatprep.subr.mxu0 0.0
    %114 = vmatpush1.msra.mxu0 %v89
    %115 = vmatprep.subr.mxu0 0.0
    %116 = vmatpush1.msra.mxu0 %v90
    %117 = vmatprep.subr.mxu0 0.0
    %118 = vmatpush1.msra.mxu0 %v91
    %119 = vmatprep.subr.mxu0 0.0
    %120 = vmatpush1.msra.mxu0 %v92
    %121 = vmatprep.subr.mxu0 0.0
    %122 = vmatpush1.msra.mxu0 %v93
    %123 = vmatprep.subr.mxu0 0.0
    %124 = vmatpush1.msra.mxu0 %v94
    %125 = vmatprep.subr.mxu0 0.0
    %126 = vmatpush1.msra.mxu0 %v95
    %127 = vmatprep.subr.mxu0 0.0
    %128 = vmatpush1.msra.mxu0 %v96
    %129 = vmatprep.subr.mxu0 0.0
    %130 = vmatpush1.msra.mxu0 0.0
    %131 = vmatprep.subr.mxu0 0.0
    %132 = vmatpush1.msra.mxu0 0.0
    %133 = vmatprep.subr.mxu0 0.0
    %134 = vmatpush1.msra.mxu0 0.0
    %135 = vmatprep.subr.mxu0 0.0
    %136 = vmatpush1.msra.mxu0 0.0
    %137 = vmatprep.subr.mxu0 0.0
    %138 = vmatpush1.msra.mxu0 0.0
    %139 = vmatprep.subr.mxu0 0.0
    %140 = vmatpush1.msra.mxu0 0.0
    %141 = vmatprep.subr.mxu0 0.0
    %142 = vmatpush1.msra.mxu0 0.0
    %143 = vmatprep.subr.mxu0 0.0
    %144 = vmatpush1.msra.mxu0 0.0
    %145 = vmatprep.subr.mxu0 0.0
    %146 = vmatpush1.msra.mxu0 0.0
    %147 = vmatprep.subr.mxu0 0.0
    %148 = vmatpush1.msra.mxu0 0.0
    %149 = vmatprep.subr.mxu0 0.0
    %150 = vmatpush1.msra.mxu0 0.0
    %151 = vmatprep.subr.mxu0 0.0
    %152 = vmatpush1.msra.mxu0 0.0
    %153 = vmatprep.subr.mxu0 0.0
    %154 = vmatpush1.msra.mxu0 0.0
    %155 = vmatprep.subr.mxu0 0.0
    %156 = vmatpush1.msra.mxu0 0.0
    %157 = vmatprep.subr.mxu0 0.0
    %158 = vmatpush1.msra.mxu0 0.0
    %159 = vmatprep.subr.mxu0 0.0
    %160 = vmatpush1.msra.mxu0 0.0
    %161 = vmatprep.mubr.f32.mxu0 0.0
    %162 = vmatmul.mubr.f32.gmra.mrb[0].mxu0 %v79
    %v163 = vpop.f32.mrb[0].mxu0
    %v164 = vadd.f32 0.0, %v163
    %v165 = vpop.f32.mrb[0].mxu0
    %166 = vdwg.mxu0
    %v167 = vadd.f32 %v80, %v164
    %168 = vst [vmem:[#allocation2] sm:$0xff] %v167
    %v169 = vld [vmem:[#allocation3] sm:$0xff]
    %v170 = vld [vmem:[#allocation8] sm:$0xff]
    %v171 = vld [vmem:[#allocation8 + $0x8] sm:$0xff]
    %v172 = vld [vmem:[#allocation8 + $0x10] sm:$0xff]
    %v173 = vld [vmem:[#allocation8 + $0x18] sm:$0xff]
    %v174 = vld [vmem:[#allocation8 + $0x20] sm:$0xff]
    %v175 = vld [vmem:[#allocation8 + $0x28] sm:$0xff]
    %v176 = vld [vmem:[#allocation8 + $0x30] sm:$0xff]
    %v177 = vld [vmem:[#allocation8 + $0x38] sm:$0xff]
    %v178 = vld [vmem:[#allocation8 + $0x40] sm:$0xff]
    %v179 = vld [vmem:[#allocation8 + $0x48] sm:$0xff]
    %v180 = vld [vmem:[#allocation8 + $0x50] sm:$0xff]
    %v181 = vld [vmem:[#allocation8 + $0x58] sm:$0xff]
    %v182 = vld [vmem:[#allocation8 + $0x60] sm:$0xff]
    %v183 = vld [vmem:[#allocation8 + $0x68] sm:$0xff]
    %v184 = vld [vmem:[#allocation8 + $0x70] sm:$0xff]
    %v185 = vld [vmem:[#allocation8 + $0x78] sm:$0xff]
    %186 = vmatprep.subr.mxu0 0.0
    %187 = vmatpush1.msra.mxu0 %v170
    %188 = vmatprep.subr.mxu0 0.0
    %189 = vmatpush1.msra.mxu0 %v171
    %190 = vmatprep.subr.mxu0 0.0
    %191 = vmatpush1.msra.mxu0 %v172
    %192 = vmatprep.subr.mxu0 0.0
    %193 = vmatpush1.msra.mxu0 %v173
    %194 = vmatprep.subr.mxu0 0.0
    %195 = vmatpush1.msra.mxu0 %v174
    %196 = vmatprep.subr.mxu0 0.0
    %197 = vmatpush1.msra.mxu0 %v175
    %198 = vmatprep.subr.mxu0 0.0
    %199 = vmatpush1.msra.mxu0 %v176
    %200 = vmatprep.subr.mxu0 0.0
    %201 = vmatpush1.msra.mxu0 %v177
    %202 = vmatprep.subr.mxu0 0.0
    %203 = vmatpush1.msra.mxu0 %v178
    %204 = vmatprep.subr.mxu0 0.0
    %205 = vmatpush1.msra.mxu0 %v179
    %206 = vmatprep.subr.mxu0 0.0
    %207 = vmatpush1.msra.mxu0 %v180
    %208 = vmatprep.subr.mxu0 0.0
    %209 = vmatpush1.msra.mxu0 %v181
    %210 = vmatprep.subr.mxu0 0.0
    %211 = vmatpush1.msra.mxu0 %v182
    %212 = vmatprep.subr.mxu0 0.0
    %213 = vmatpush1.msra.mxu0 %v183
    %214 = vmatprep.subr.mxu0 0.0
    %215 = vmatpush1.msra.mxu0 %v184
    %216 = vmatprep.subr.mxu0 0.0
    %217 = vmatpush1.msra.mxu0 %v185
    %218 = vmatprep.subr.mxu0 0.0
    %219 = vmatpush1.msra.mxu0 0.0
    %220 = vmatprep.subr.mxu0 0.0
    %221 = vmatpush1.msra.mxu0 0.0
    %222 = vmatprep.subr.mxu0 0.0
    %223 = vmatpush1.msra.mxu0 0.0
    %224 = vmatprep.subr.mxu0 0.0
    %225 = vmatpush1.msra.mxu0 0.0
    %226 = vmatprep.subr.mxu0 0.0
    %227 = vmatpush1.msra.mxu0 0.0
    %228 = vmatprep.subr.mxu0 0.0
    %229 = vmatpush1.msra.mxu0 0.0
    %230 = vmatprep.subr.mxu0 0.0
    %231 = vmatpush1.msra.mxu0 0.0
    %232 = vmatprep.subr.mxu0 0.0
    %233 = vmatpush1.msra.mxu0 0.0
    %234 = vmatprep.subr.mxu0 0.0
    %235 = vmatpush1.msra.mxu0 0.0
    %236 = vmatprep.subr.mxu0 0.0
    %237 = vmatpush1.msra.mxu0 0.0
    %238 = vmatprep.subr.mxu0 0.0
    %239 = vmatpush1.msra.mxu0 0.0
    %240 = vmatprep.subr.mxu0 0.0
    %241 = vmatpush1.msra.mxu0 0.0
    %242 = vmatprep.subr.mxu0 0.0
    %243 = vmatpush1.msra.mxu0 0.0
    %244 = vmatprep.subr.mxu0 0.0
    %245 = vmatpush1.msra.mxu0 0.0
    %246 = vmatprep.subr.mxu0 0.0
    %247 = vmatpush1.msra.mxu0 0.0
    %248 = vmatprep.subr.mxu0 0.0
    %249 = vmatpush1.msra.mxu0 0.0
    %250 = vmatprep.mubr.f32.mxu0 0.0
    %251 = vmatmul.mubr.f32.gmra.mrb[0].mxu0 %v79
    %v252 = vpop.f32.mrb[0].mxu0
    %v253 = vadd.f32 0.0, %v252
    %v254 = vpop.f32.mrb[0].mxu0
    %255 = vdwg.mxu0
    %v256 = vadd.f32 %v169, %v253
    %257 = vst [vmem:[#allocation3] sm:$0xff] %v256
    %v258 = vld [vmem:[#allocation4] sm:$0xff]
    %v259 = vld [vmem:[#allocation10] sm:$0xff]
    %v260 = vld [vmem:[#allocation10 + $0x8] sm:$0xff]
    %v261 = vld [vmem:[#allocation10 + $0x10] sm:$0xff]
    %v262 = vld [vmem:[#allocation10 + $0x18] sm:$0xff]
    %v263 = vld [vmem:[#allocation10 + $0x20] sm:$0xff]
    %v264 = vld [vmem:[#allocation10 + $0x28] sm:$0xff]
    %v265 = vld [vmem:[#allocation10 + $0x30] sm:$0xff]
    %v266 = vld [vmem:[#allocation10 + $0x38] sm:$0xff]
    %v267 = vld [vmem:[#allocation10 + $0x40] sm:$0xff]
    %v268 = vld [vmem:[#allocation10 + $0x48] sm:$0xff]
    %v269 = vld [vmem:[#allocation10 + $0x50] sm:$0xff]
    %v270 = vld [vmem:[#allocation10 + $0x58] sm:$0xff]
    %v271 = vld [vmem:[#allocation10 + $0x60] sm:$0xff]
    %v272 = vld [vmem:[#allocation10 + $0x68] sm:$0xff]
    %v273 = vld [vmem:[#allocation10 + $0x70] sm:$0xff]
    %v274 = vld [vmem:[#allocation10 + $0x78] sm:$0xff]
    %275 = vmatprep.subr.mxu0 0.0
    %276 = vmatpush1.msra.mxu0 %v259
    %277 = vmatprep.subr.mxu0 0.0
    %278 = vmatpush1.msra.mxu0 %v260
    %279 = vmatprep.subr.mxu0 0.0
    %280 = vmatpush1.msra.mxu0 %v261
    %281 = vmatprep.subr.mxu0 0.0
    %282 = vmatpush1.msra.mxu0 %v262
    %283 = vmatprep.subr.mxu0 0.0
    %284 = vmatpush1.msra.mxu0 %v263
    %285 = vmatprep.subr.mxu0 0.0
    %286 = vmatpush1.msra.mxu0 %v264
    %287 = vmatprep.subr.mxu0 0.0
    %288 = vmatpush1.msra.mxu0 %v265
    %289 = vmatprep.subr.mxu0 0.0
    %290 = vmatpush1.msra.mxu0 %v266
    %291 = vmatprep.subr.mxu0 0.0
    %292 = vmatpush1.msra.mxu0 %v267
    %293 = vmatprep.subr.mxu0 0.0
    %294 = vmatpush1.msra.mxu0 %v268
    %295 = vmatprep.subr.mxu0 0.0
    %296 = vmatpush1.msra.mxu0 %v269
    %297 = vmatprep.subr.mxu0 0.0
    %298 = vmatpush1.msra.mxu0 %v270
    %299 = vmatprep.subr.mxu0 0.0
    %300 = vmatpush1.msra.mxu0 %v271
    %301 = vmatprep.subr.mxu0 0.0
    %302 = vmatpush1.msra.mxu0 %v272
    %303 = vmatprep.subr.mxu0 0.0
    %304 = vmatpush1.msra.mxu0 %v273
    %305 = vmatprep.subr.mxu0 0.0
    %306 = vmatpush1.msra.mxu0 %v274
    %307 = vmatprep.subr.mxu0 0.0
    %308 = vmatpush1.msra.mxu0 0.0
    %309 = vmatprep.subr.mxu0 0.0
    %310 = vmatpush1.msra.mxu0 0.0
    %311 = vmatprep.subr.mxu0 0.0
    %312 = vmatpush1.msra.mxu0 0.0
    %313 = vmatprep.subr.mxu0 0.0
    %314 = vmatpush1.msra.mxu0 0.0
    %315 = vmatprep.subr.mxu0 0.0
    %316 = vmatpush1.msra.mxu0 0.0
    %317 = vmatprep.subr.mxu0 0.0
    %318 = vmatpush1.msra.mxu0 0.0
    %319 = vmatprep.subr.mxu0 0.0
    %320 = vmatpush1.msra.mxu0 0.0
    %321 = vmatprep.subr.mxu0 0.0
    %322 = vmatpush1.msra.mxu0 0.0
    %323 = vmatprep.subr.mxu0 0.0
    %324 = vmatpush1.msra.mxu0 0.0
    %325 = vmatprep.subr.mxu0 0.0
    %326 = vmatpush1.msra.mxu0 0.0
    %327 = vmatprep.subr.mxu0 0.0
    %328 = vmatpush1.msra.mxu0 0.0
    %329 = vmatprep.subr.mxu0 0.0
    %330 = vmatpush1.msra.mxu0 0.0
    %331 = vmatprep.subr.mxu0 0.0
    %332 = vmatpush1.msra.mxu0 0.0
    %333 = vmatprep.subr.mxu0 0.0
    %334 = vmatpush1.msra.mxu0 0.0
    %335 = vmatprep.subr.mxu0 0.0
    %336 = vmatpush1.msra.mxu0 0.0
    %337 = vmatprep.subr.mxu0 0.0
    %338 = vmatpush1.msra.mxu0 0.0
    %339 = vmatprep.mubr.f32.mxu0 0.0
    %340 = vmatmul.mubr.f32.gmra.mrb[0].mxu0 %v79
    %v341 = vpop.f32.mrb[0].mxu0
    %v342 = vadd.f32 0.0, %v341
    %v343 = vpop.f32.mrb[0].mxu0
    %344 = vdwg.mxu0
    %v345 = vadd.f32 %v258, %v342
    %346 = vst [vmem:[#allocation4] sm:$0xff] %v345
    // Predicated region
    $region46: #{qkv.1} parent=1 // pred_check
      %p347 = pneg %p72
    $region47: #{qkv.1} parent=1 // pred_check_branch
      %349 = sbr.rel (%p347) target = $region49
    $region48: #{qkv.1} parent=1 // pred_region
      %v350 = vld [vmem:[#allocation2] sm:$0xff]
      %v351 = vld [vmem:[%s4] sm:$0x1]
      %v353 = vlaneseq
      %v354 = vshrl.u32 %v353, 7
      %v355 = vsub.s32 0, %v354
      %v356 = vrot.slane %v351, %v355
      %v358 = vadd.f32 %v350, %v356
      %359 = vst [vmem:[#allocation11] sm:$0xff] %v358
      %v360 = vld [vmem:[#allocation3] sm:$0xff]
      %v361 = vld [vmem:[%s5] sm:$0x1]
      %v363 = vlaneseq
      %v364 = vshrl.u32 %v363, 7
      %v365 = vsub.s32 0, %v364
      %v366 = vrot.slane %v361, %v365
      %v368 = vadd.f32 %v360, %v366
      %369 = vst [vmem:[#allocation12] sm:$0xff] %v368
      %v370 = vld [vmem:[#allocation4] sm:$0xff]
      %v371 = vld [vmem:[%s6] sm:$0x1]
      %v373 = vlaneseq
      %v374 = vshrl.u32 %v373, 7
      %v375 = vsub.s32 0, %v374
      %v376 = vrot.slane %v371, %v375
      %v378 = vadd.f32 %v370, %v376
      %379 = vst [vmem:[#allocation14] sm:$0xff] %v378
    $region49: #{qkv.1} parent=1 // pred_fallthru
      _
    // Predicated region
    $region50: #{qkv.1} parent=1 // pred_check
      _
    $region51: #{qkv.1} parent=1 // pred_check_branch
      %381 = sbr.rel (0) target = $region53
    $region52: #{qkv.1} parent=1 // pred_region
      %s383 = ssub.s32 128, 128
      %384 = vsyncadd [#allocation7], %s383
      %s386 = sshll.u32 [#allocation11], 4
      %s387 = int_to_ptr.vmem [resolvable:$true] %s386
      %389 = dma.vmem_to_hbm [thread:$0]  %s387, 128, %s7, [#allocation7]
    $region53: #{qkv.1} parent=1 // pred_fallthru
      _
    // Predicated region
    $region54: #{qkv.1} parent=1 // pred_check
      _
    $region55: #{qkv.1} parent=1 // pred_check_branch
      %391 = sbr.rel (0) target = $region57
    $region56: #{qkv.1} parent=1 // pred_region
      %s393 = ssub.s32 128, 128
      %394 = vsyncadd [#allocation13], %s393
      %s396 = sshll.u32 [#allocation12], 4
      %s397 = int_to_ptr.vmem [resolvable:$true] %s396
      %399 = dma.vmem_to_hbm [thread:$0]  %s397, 128, %s8, [#allocation13]
    $region57: #{qkv.1} parent=1 // pred_fallthru
      _
    // Predicated region
    $region58: #{qkv.1} parent=1 // pred_check
      _
    $region59: #{qkv.1} parent=1 // pred_check_branch
      %401 = sbr.rel (0) target = $region61
    $region60: #{qkv.1} parent=1 // pred_region
      %s403 = ssub.s32 128, 128
      %404 = vsyncadd [#allocation13], %s403
      %s406 = sshll.u32 [#allocation14], 4
      %s407 = int_to_ptr.vmem [resolvable:$true] %s406
      %409 = dma.vmem_to_hbm [thread:$0]  %s407, 128, %s9, [#allocation13]
    $region61: #{qkv.1} parent=1 // pred_fallthru
      _
    // Predicated region
    $region62: #{qkv.1} parent=1 // pred_check
      _
    $region63: #{qkv.1} parent=1 // pred_check_branch
      %411 = sbr.rel (0) target = $region65
    $region64: #{qkv.1} parent=1 // pred_region
      %412 = dma.done [#allocation7], 128
    $region65: #{qkv.1} parent=1 // pred_fallthru
      _
    // Predicated region
    $region66: #{qkv.1} parent=1 // pred_check
      _
    $region67: #{qkv.1} parent=1 // pred_check_branch
      %414 = sbr.rel (0) target = $region69
    $region68: #{qkv.1} parent=1 // pred_region
      %415 = dma.done [#allocation13], 128
    $region69: #{qkv.1} parent=1 // pred_fallthru
      _
    // Predicated region
    $region70: #{qkv.1} parent=1 // pred_check
      _
    $region71: #{qkv.1} parent=1 // pred_check_branch
      %417 = sbr.rel (0) target = $region73
    $region72: #{qkv.1} parent=1 // pred_region
      %418 = dma.done [#allocation13], 128
    $region73: #{qkv.1} parent=1 // pred_fallthru
      _
    %419 = vsyncpa [#allocation6], 1
    %420 = vsyncpa [#allocation9], 1
    %421 = vsyncpa [#allocation7], 1
    %422 = vsyncpa [#allocation13], 1

</llo_original>
